<compile_context>
chip_gen: v7x
topology: tpu7x:2x2x1
jax: 0.10.0
libtpu: 0.0.40
codegen_flags: <defaults>
</compile_context>

<pallas_src>
import functools
import math
import warnings

import numpy as np
import jax
import jax.numpy as jnp
from jax import lax
from jax.experimental import pallas as pl
from jax.experimental.pallas import tpu as pltpu

# --- constants for the bounded-range sine ------------------------------------
_INV_PI = float(1.0 / np.pi)
_PI_F32 = float(np.float32(np.pi))
# 2-constant Cody-Waite split of pi: PI_HI has 8 significant mantissa bits, so
# m*PI_HI is exact for |m| < 2^17 (|phase| < ~4e5); here |phase| <= n + pi/2 ~ 1e4.
_PI_HI = 3.140625
_PI_LO = float(math.pi - 3.140625)
# Odd Taylor coefficients for sin on [-pi/2, pi/2] (max abs error ~3.6e-6).
_S1 = -1.0 / 6.0
_S2 = 1.0 / 120.0
_S3 = -1.0 / 5040.0
_S4 = 1.0 / 362880.0


def _sinusoidal_kernel(x_ref, freq_ref, out_ref, *, half_dim):
    # x_ref:    (tm, 1)   f32 positions
    # freq_ref: (1, dim)  f32 folded frequencies [f_0..f_{h-1}, f_0..f_{h-1}] * (n/max_val)
    # out_ref:  (tm, dim) out[:, :h] = sin(x*f), out[:, h:] = cos(x*f)
    dim = out_ref.shape[-1]

    # Half-period offset per lane: 0 for the sin half, 0.5 for the cos half
    # (cos(t) = sin(t + pi/2) = (-1)^m sin(t - m*pi + pi/2), m = round(t/pi + 1/2)).
    lane = lax.broadcasted_iota(jnp.int32, (1, dim), 1)
    k_off = jnp.where(lane >= half_dim, 0.5, 0.0).astype(jnp.float32)   # (1, dim)
    r_off = k_off * _PI_F32                                             # 0 or pi/2

    phase = x_ref[...] * freq_ref[...]                  # (tm, dim), |phase| <= ~n

    # Cody-Waite reduction by pi; the pi/2 offset is applied to the SMALL residual.
    m = jnp.floor(phase * _INV_PI + k_off + 0.5)        # nearest half-period index
    r = (phase - m * _PI_HI) + r_off - m * _PI_LO       # residual in ~[-pi/2, pi/2]

    # Degree-9 odd polynomial sin(r).
    r2 = r * r
    p = r2 * _S4 + _S3
    p = r2 * p + _S2
    p = r2 * p + _S1
    s = r + (r * r2) * p

    # sin(m*pi + r) = (-1)^m * sin(r)
    odd = (m.astype(jnp.int32) & 1) == 1
    sign = jnp.where(odd, -1.0, 1.0).astype(jnp.float32)
    out_ref[...] = (s * sign).astype(out_ref.dtype)     # single full-width store


def sinusoidal_position_embeddings(x, dim, max_val, n=10000.0, *, tm=None, out_dtype=None):
    """Pallas implementation of SinusoidalPositionEmbeddings.forward.

    x: float array of arbitrary shape (...,)
    returns: array of shape (..., dim); out[..., :dim//2] = sin, out[..., dim//2:] = cos
    """
    assert dim % 2 == 0, "dim must be an even number!"
    half_dim = dim // 2
    assert half_dim > 1, "dim must be >= 4 (log(n)/(half_dim-1) would divide by zero)"
    n = float(n)
    max_val = float(max_val)
    if out_dtype is None:
        # Matches module semantics (same dtype as x).  Pass jnp.bfloat16 on
        # HBM-limited chips (v5e) if the consumer accepts it; math stays f32.
        out_dtype = x.dtype
    if dim % 128 != 0:
        warnings.warn(
            "dim is not a multiple of 128: output stores become lane-masked "
            "(vst.msk) and lose the lane-dense fast path.")

    orig_shape = x.shape
    xf = x.reshape(-1, 1).astype(jnp.float32)
    N = xf.shape[0]
    out_bytes = jnp.dtype(out_dtype).itemsize

    # --- Row-tile selection (multiple of 8). Target >= ~8 grid steps for small N
    # (v7x megacore sharding + pipeline overlap), cap at 2048 rows, and clamp so
    # 2x double-buffered output blocks stay well under v5e's 16 MiB scoped VMEM. ---
    if tm is None:
        tm = min(2048, max(8, ((-(-N // 8)) + 7) // 8 * 8))
    else:
        tm = max(8, (int(tm) + 7) // 8 * 8)
    vmem_cap_rows = max(8, ((12 * 1024 * 1024) // (2 * dim * max(out_bytes, 4))) // 8 * 8)
    tm = min(tm, vmem_cap_rows)

    # --- Host-built lane-dense frequency row (f64 math, rounded once to f32).
    # freqs_j = exp(-j * log(n)/(half_dim-1)); the n/max_val input scale is folded in.
    k = np.arange(half_dim, dtype=np.float64)
    freqs = np.exp(-k * (math.log(n) / (half_dim - 1))) * (n / max_val)
    freq_tab = jnp.asarray(
        np.concatenate([freqs, freqs]).reshape(1, dim).astype(np.float32))

    cost = pl.CostEstimate(
        flops=22 * N * dim,
        transcendentals=0,
        bytes_accessed=N * 4 + dim * 4 + N * dim * out_bytes,
    )

    out = pl.pallas_call(
        functools.partial(_sinusoidal_kernel, half_dim=half_dim),
        out_shape=jax.ShapeDtypeStruct((N, dim), out_dtype),
        grid_spec=pltpu.PrefetchScalarGridSpec(
            num_scalar_prefetch=0,
            grid=(pl.cdiv(N, tm),),            # ragged last block: OOB writes masked
            in_specs=[
                pl.BlockSpec((tm, 1), lambda i: (i, 0)),
                pl.BlockSpec((1, dim), lambda i: (0, 0)),  # constant block: no re-DMA
            ],
            out_specs=pl.BlockSpec((tm, dim), lambda i: (i, 0)),
        ),
        compiler_params=pltpu.CompilerParams(
            dimension_semantics=("parallel",),
        ),
        cost_estimate=cost,
    )(xf, freq_tab)

    return out.reshape(*orig_shape, dim)


def _reference(x, dim, max_val, n=10000.0):
    # Straight port of the PyTorch forward (all f32, same op order as torch).
    x = x.astype(jnp.float32) / float(max_val) * float(n)
    half_dim = dim // 2
    emb = math.log(float(n)) / (half_dim - 1)
    emb = jnp.exp(jnp.arange(half_dim, dtype=jnp.float32) * -emb)
    emb = x[..., None] * emb
    return jnp.concatenate((jnp.sin(emb), jnp.cos(emb)), axis=-1)


if __name__ == "__main__":
    key = jax.random.PRNGKey(0)
    dim = 128        # output embedding dim (even; multiple of 128 = lane-dense path)
    max_val = 1.0
    n = 10000.0

    # Small input consistent with the module: arbitrary-shaped scalar positions.
    x = jax.random.uniform(key, (2, 128), dtype=jnp.float32, minval=0.0, maxval=max_val)

    out = sinusoidal_position_embeddings(x, dim, max_val, n)
    out = jax.block_until_ready(out)

    ref = _reference(x, dim, max_val, n)
    assert out.shape == (2, 128, dim), out.shape
    # Phases reach ~n (=1e4).  Folding n/max_val into the f32 frequency table
    # reassociates f32 roundings (~few ulp of the phase, ~1e-3 at 1e4); the custom
    # sine itself contributes < 4e-6.  5e-3 covers it.
    err = jnp.max(jnp.abs(out - ref))
    assert err < 5e-3, f"max abs error {err} vs reference"

    print("KERNEL_OK")
</pallas_src>

<mosaic_0001>
module attributes {stable_mosaic.version = 11 : i64} {
  func.func @_sinusoidal_kernel(%arg0: i32, %arg1: memref<32x1xf32, #tpu.memory_space<vmem>>, %arg2: memref<1x128xf32, #tpu.memory_space<vmem>>, %arg3: memref<32x128xf32, #tpu.memory_space<vmem>>) attributes {dimension_semantics = [#tpu.dimension_semantics<parallel>], iteration_bounds = array<i64: 8>, scalar_prefetch = 0 : i64, scratch_operands = 0 : i64, tpu.core_type = #tpu.core_type<tc>, window_params = [{transform_indices = @transform_0, window_bounds = array<i64: 32, 1>}, {pipeline_mode = #tpu.pipeline_mode<synchronous>, transform_indices = @transform_1, window_bounds = array<i64: 1, 128>}, {transform_indices = @transform_2, window_bounds = array<i64: 32, 128>}]} {
    %0 = tpu.iota {dimensions = array<i32: 1>} : vector<1x128xi32>
    %c64_i32 = arith.constant 64 : i32
    %1 = vector.broadcast %c64_i32 : i32 to vector<1x128xi32>
    %2 = arith.cmpi sge, %0, %1 : vector<1x128xi32>
    %cst = arith.constant 5.000000e-01 : f32
    %cst_0 = arith.constant 0.000000e+00 : f32
    %3 = vector.broadcast %cst : f32 to vector<1x128xf32>
    %4 = vector.broadcast %cst_0 : f32 to vector<1x128xf32>
    %5 = arith.select %2, %3, %4 : vector<1x128xi1>, vector<1x128xf32>
    %cst_1 = arith.constant 3.14159274 : f32
    %6 = vector.broadcast %cst_1 : f32 to vector<1x128xf32>
    %7 = arith.mulf %5, %6 : vector<1x128xf32>
    %c0 = arith.constant 0 : index
    %c0_2 = arith.constant 0 : index
    %8 = vector.load %arg1[%c0, %c0_2] : memref<32x1xf32, #tpu.memory_space<vmem>>, vector<32x1xf32>
    %c0_3 = arith.constant 0 : index
    %c0_4 = arith.constant 0 : index
    %9 = vector.load %arg2[%c0_3, %c0_4] : memref<1x128xf32, #tpu.memory_space<vmem>>, vector<1x128xf32>
    %10 = vector.broadcast %8 : vector<32x1xf32> to vector<32x128xf32>
    %11 = vector.broadcast %9 : vector<1x128xf32> to vector<32x128xf32>
    %12 = arith.mulf %10, %11 : vector<32x128xf32>
    %cst_5 = arith.constant 0.318309873 : f32
    %13 = vector.broadcast %cst_5 : f32 to vector<32x128xf32>
    %14 = arith.mulf %12, %13 : vector<32x128xf32>
    %15 = vector.broadcast %5 : vector<1x128xf32> to vector<32x128xf32>
    %16 = arith.addf %14, %15 : vector<32x128xf32>
    %cst_6 = arith.constant 5.000000e-01 : f32
    %17 = vector.broadcast %cst_6 : f32 to vector<32x128xf32>
    %18 = arith.addf %16, %17 : vector<32x128xf32>
    %19 = math.floor %18 : vector<32x128xf32>
    %cst_7 = arith.constant 3.140625 : f32
    %20 = vector.broadcast %cst_7 : f32 to vector<32x128xf32>
    %21 = arith.mulf %19, %20 : vector<32x128xf32>
    %22 = arith.subf %12, %21 : vector<32x128xf32>
    %23 = vector.broadcast %7 : vector<1x128xf32> to vector<32x128xf32>
    %24 = arith.addf %22, %23 : vector<32x128xf32>
    %cst_8 = arith.constant 9.67653584E-4 : f32
    %25 = vector.broadcast %cst_8 : f32 to vector<32x128xf32>
    %26 = arith.mulf %19, %25 : vector<32x128xf32>
    %27 = arith.subf %24, %26 : vector<32x128xf32>
    %28 = arith.mulf %27, %27 : vector<32x128xf32>
    %cst_9 = arith.constant 2.75573188E-6 : f32
    %29 = vector.broadcast %cst_9 : f32 to vector<32x128xf32>
    %30 = arith.mulf %28, %29 : vector<32x128xf32>
    %cst_10 = arith.constant -1.98412701E-4 : f32
    %31 = vector.broadcast %cst_10 : f32 to vector<32x128xf32>
    %32 = arith.addf %30, %31 : vector<32x128xf32>
    %33 = arith.mulf %28, %32 : vector<32x128xf32>
    %cst_11 = arith.constant 0.00833333377 : f32
    %34 = vector.broadcast %cst_11 : f32 to vector<32x128xf32>
    %35 = arith.addf %33, %34 : vector<32x128xf32>
    %36 = arith.mulf %28, %35 : vector<32x128xf32>
    %cst_12 = arith.constant -0.166666672 : f32
    %37 = vector.broadcast %cst_12 : f32 to vector<32x128xf32>
    %38 = arith.addf %36, %37 : vector<32x128xf32>
    %39 = arith.mulf %27, %28 : vector<32x128xf32>
    %40 = arith.mulf %39, %38 : vector<32x128xf32>
    %41 = arith.addf %27, %40 : vector<32x128xf32>
    %42 = arith.fptosi %19 : vector<32x128xf32> to vector<32x128xi32>
    %c1_i32 = arith.constant 1 : i32
    %43 = vector.broadcast %c1_i32 : i32 to vector<32x128xi32>
    %44 = arith.andi %42, %43 : vector<32x128xi32>
    %c1_i32_13 = arith.constant 1 : i32
    %45 = vector.broadcast %c1_i32_13 : i32 to vector<32x128xi32>
    %46 = arith.cmpi eq, %44, %45 : vector<32x128xi32>
    %cst_14 = arith.constant -1.000000e+00 : f32
    %cst_15 = arith.constant 1.000000e+00 : f32
    %47 = vector.broadcast %cst_14 : f32 to vector<32x128xf32>
    %48 = vector.broadcast %cst_15 : f32 to vector<32x128xf32>
    %49 = arith.select %46, %47, %48 : vector<32x128xi1>, vector<32x128xf32>
    %50 = arith.mulf %41, %49 : vector<32x128xf32>
    %c0_16 = arith.constant 0 : index
    %c0_17 = arith.constant 0 : index
    %51 = vector.load %arg3[%c0_16, %c0_17] : memref<32x128xf32, #tpu.memory_space<vmem>>, vector<32x128xf32>
    tpu.vector_store %arg3[%c0_16, %c0_17], %50 {strides = array<i32>} : memref<32x128xf32, #tpu.memory_space<vmem>>, vector<32x128xf32>,
    return
  }
  func.func @transform_0(%arg0: i32) -> (i32, i32) {
    %c0_i32 = arith.constant 0 : i32
    %c0_i32_0 = arith.constant 0 : i32
    return %arg0, %c0_i32 : i32, i32
  }
  func.func @transform_1(%arg0: i32) -> (i32, i32) {
    %c0_i32 = arith.constant 0 : i32
    %c0_i32_0 = arith.constant 0 : i32
    %c0_i32_1 = arith.constant 0 : i32
    return %c0_i32, %c0_i32_0 : i32, i32
  }
  func.func @transform_2(%arg0: i32) -> (i32, i32) {
    %c0_i32 = arith.constant 0 : i32
    %c0_i32_0 = arith.constant 0 : i32
    return %arg0, %c0_i32 : i32, i32
  }
}

</mosaic_0001>

<llo_original>
// kernel: tpu_custom_call.1
$region0: #{tpu_custom_call.1}
  #allocation0 [shape = 'u32[]', space=smem, size = 0x4, offset = 0x4, fixed_abs, tag = 'smem constant byte address 0x4 - core index']
  #allocation1 [shape = 'u32[144,128]{1,0:T(1,128)}', space=vmem, size = 0x12000, scoped, tag = 'internal scratch']
  %s0 = inlined_call_operand.vmem [shape: f32[256,1], index: 0, kind: input, shape index: {}]
  %s1 = inlined_call_operand.vmem [shape: f32[1,128], index: 1, kind: input, shape index: {}]
  %s2 = inlined_call_operand.hbm [shape: f32[256,128], index: 2, kind: output, shape index: {}]
  %s3 = sld [smem:[#allocation0]]
  $region41: #{tpu_custom_call.1} parent=0
    _
  %s5 = ssub.s32 1, %s3
  %s6 = scalar_select 0, %s5, %s3
  $region1: #{tpu_custom_call.1} parent=0
    #allocation2 [shape = 'u8[32768]{0}', space=vmem, size = 0x8000, scoped, tag = 'output window, operand 0']
    #allocation3 [shape = 's32[2]{0}', space=sflag, size = 0x8, scoped, tag = 'scoped memory for tpu_custom_call.1']
    %7 = vsyncpa [#allocation3], 0
    %s8 = scalar_lea.sflag [#allocation3], 1
    %9 = vsyncpa %s8, 0
    loop: start=0, step=1, limit=10
    $region2: #{tpu_custom_call.1} parent=1 // loop_pre_header
      _
    $region3: #{tpu_custom_call.1} parent=1 // loop_header
      %s11 = sphi 0, %s15
      %p12 = scmp.ge.s32.totalorder %s11, 10
      %s21 = sphi 0, %s23
      %s24 = sphi 0, %s21
      %s25 = sphi 0, %s24
      %s41 = sphi 0, %s25
      %s45 = sphi 0, %s45
      %s47 = sphi 0, %s45
      %s48 = sphi 0, %s47
      %s62 = sphi 0, %s48
      %s68 = sphi 0, %s70
      %s71 = sphi 0, %s68
      %s72 = sphi 0, %s71
      %s88 = sphi 0, %s72
    $region4: #{tpu_custom_call.1} parent=1 // loop_header_branch
      %14 = sbr.rel (%p12) target = $region8
    $region5: #{tpu_custom_call.1} parent=1 // loop_body
      %s16 = ssub.s32 %s11, 1
      %s17 = ssub.s32 %s11, 2
      %s18 = sadd.s32 %s11, 1
      %s19 = ssub.s32 %s11, %s18
      %p20 = scmp.eq.s32.totalorder %s19, 0
      %s22 = sadd.s32 %s21, 1
      %s23 = scalar_select %p20, %s21, %s22
      %p26 = pneg %p20
      %p27 = scmp.eq.s32.totalorder %s11, 7
      %p28 = por %p26, %p27
      %p29 = scmp.ne.s32.totalorder %s21, %s24
      %p30 = scmp.eq.s32.totalorder %s11, 0
      %p31 = por %p29, %p30
      %p32 = scmp.ne.s32.totalorder %s21, %s24
      %p33 = scmp.eq.s32.totalorder %s16, 7
      %p34 = por %p32, %p33
      %p35 = scmp.ne.s32.totalorder %s24, %s25
      %p36 = scmp.eq.s32.totalorder %s16, 0
      %p37 = por %p35, %p36
      %p38 = scmp.ne.s32.totalorder %s24, %s25
      %p39 = scmp.eq.s32.totalorder %s17, 7
      %p40 = por %p38, %p39
      %p42 = scmp.ne.s32.totalorder %s25, %s41
      %p43 = scmp.eq.s32.totalorder %s17, 0
      %p44 = por %p42, %p43
      %s46 = sadd.s32 %s45, 1
      %p49 = scmp.eq.s32.totalorder %s11, 7
      %p50 = scmp.ne.s32.totalorder %s45, %s47
      %p51 = scmp.eq.s32.totalorder %s11, 0
      %p52 = por %p50, %p51
      %p53 = scmp.ne.s32.totalorder %s45, %s47
      %p54 = scmp.eq.s32.totalorder %s16, 7
      %p55 = por %p53, %p54
      %p56 = scmp.ne.s32.totalorder %s47, %s48
      %p57 = scmp.eq.s32.totalorder %s16, 0
      %p58 = por %p56, %p57
      %p59 = scmp.ne.s32.totalorder %s47, %s48
      %p60 = scmp.eq.s32.totalorder %s17, 7
      %p61 = por %p59, %p60
      %p63 = scmp.ne.s32.totalorder %s48, %s62
      %p64 = scmp.eq.s32.totalorder %s17, 0
      %p65 = por %p63, %p64
      %s66 = ssub.s32 %s11, %s18
      %p67 = scmp.eq.s32.totalorder %s66, 0
      %s69 = sadd.s32 %s68, 1
      %s70 = scalar_select %p67, %s68, %s69
      %p73 = pneg %p67
      %p74 = scmp.eq.s32.totalorder %s11, 7
      %p75 = por %p73, %p74
      %p76 = scmp.ne.s32.totalorder %s68, %s71
      %p77 = scmp.eq.s32.totalorder %s11, 0
      %p78 = por %p76, %p77
      %p79 = scmp.ne.s32.totalorder %s68, %s71
      %p80 = scmp.eq.s32.totalorder %s16, 7
      %p81 = por %p79, %p80
      %p82 = scmp.ne.s32.totalorder %s71, %s72
      %p83 = scmp.eq.s32.totalorder %s16, 0
      %p84 = por %p82, %p83
      %p85 = scmp.ne.s32.totalorder %s71, %s72
      %p86 = scmp.eq.s32.totalorder %s17, 7
      %p87 = por %p85, %p86
      %p89 = scmp.ne.s32.totalorder %s72, %s88
      %p90 = scmp.eq.s32.totalorder %s17, 0
      %p91 = por %p89, %p90
      %p92 = scmp.le.s32.totalorder 1, %s11
      %p93 = scmp.lt.s32.totalorder %s11, 9
      %p94 = pnand %p92, %p93
      %p95 = pneg %p94
      // Predicated region
      $region9: #{tpu_custom_call.1} parent=5 // pred_check
        _
      $region10: #{tpu_custom_call.1} parent=5 // pred_check_branch
        %97 = sbr.rel (%p94) target = $region12
      $region11: #{tpu_custom_call.1} parent=5 // pred_region
        %s98 = ssub.s32 %s11, 1
        // Predicated region
        $region13: #{tpu_custom_call.1} parent=11 // pred_check
          %p99 = pneg %p58
        $region14: #{tpu_custom_call.1} parent=11 // pred_check_branch
          %101 = sbr.rel (%p99) target = $region16
        $region15: #{tpu_custom_call.1} parent=11 // pred_region
          _
        $region16: #{tpu_custom_call.1} parent=11 // pred_fallthru
          _
      $region12: #{tpu_custom_call.1} parent=5 // pred_fallthru
        _
      %p102 = scmp.lt.s32.totalorder %s11, 8
      // Predicated region
      $region17: #{tpu_custom_call.1} parent=5 // pred_check
        %p103 = pneg %p102
      $region18: #{tpu_custom_call.1} parent=5 // pred_check_branch
        %105 = sbr.rel (%p103) target = $region20
      $region19: #{tpu_custom_call.1} parent=5 // pred_region
        // Predicated region
        $region21: #{tpu_custom_call.1} parent=19 // pred_check
          %p106 = pneg %p31
        $region22: #{tpu_custom_call.1} parent=19 // pred_check_branch
          %108 = sbr.rel (%p106) target = $region24
        $region23: #{tpu_custom_call.1} parent=19 // pred_region
          %s109 = smul.u32 4, %s11
          %p110 = scmp.lt.s32.totalorder %s109, 31
          %s111 = scalar_select %p110, %s109, 31
          %s112 = smul.addr %s111, 8
          %s113 = scalar_lea.vmem %s0, %s112
          %s114 = smul.u32 4, %s11
        $region24: #{tpu_custom_call.1} parent=19 // pred_fallthru
          _
      $region20: #{tpu_custom_call.1} parent=5 // pred_fallthru
        _
      %p115 = scmp.le.s32.totalorder 1, %s11
      %p116 = scmp.lt.s32.totalorder %s11, 9
      %p117 = pnand %p115, %p116
      %p118 = pneg %p117
      // Predicated region
      $region25: #{tpu_custom_call.1} parent=5 // pred_check
        _
      $region26: #{tpu_custom_call.1} parent=5 // pred_check_branch
        %120 = sbr.rel (%p117) target = $region28
      $region27: #{tpu_custom_call.1} parent=5 // pred_region
        %s121 = ssub.s32 %s11, 1
        %s122 = smul.u32 4, %s16
        %p123 = scmp.lt.s32.totalorder %s122, 31
        %s124 = scalar_select %p123, %s122, 31
        %s125 = smul.addr %s124, 8
        %s126 = scalar_lea.vmem %s0, %s125
        %p127 = pneg %p37
        %p128 = pneg %p34
        %p129 = pneg %p58
        %p130 = pneg %p55
        %p131 = pneg %p84
        %p132 = pneg %p81
        %s133 = sand.u32 %s71, 1
        %s134 = scalar_lea.sflag [#allocation3], %s133
        %s135 = sand.u32 %s71, 1
        %s136 = smul.addr %s135, 32
        %s137 = scalar_lea.vmem [#allocation2], %s136
        %s138 = smul.u32 4, %s16
        %p139 = scmp.lt.s32.totalorder %s138, 31
        %s140 = scalar_select %p139, %s138, 31
        %s141 = smul.addr %s140, 8
        %s142 = scalar_lea.vmem %s0, %s141
        %s143 = smul.u32 4, %s16
        %s144 = smul.u32 4, %s16
        %v145 = vlaneseq
        %v146 = vand.u32 %v145, 127
        %vm147 = vcmp.ge.s32.totalorder %v146, 64
        %v148 = vsel %vm147, 0.5, 0.0
        %v149 = vmul.f32 %v148, 3.1415927
        %v150 = vld [vmem:[%s142] sm:$0xff]
        %v151 = vld [vmem:[%s142 + $0x8] sm:$0xff]
        %v152 = vld [vmem:[%s142 + $0x10] sm:$0xff]
        %v153 = vld [vmem:[%s142 + $0x18] sm:$0xff]
        %v154 = vld [vmem:[%s1] sm:$0x1]
        %156 = vset.pattern.permute.xlu0 0
        %157 = vperm.xlu0 %156, %v150
        %v158 = vpop.permute.xlu0 %157
        %161 = vset.pattern.permute.xlu0 0
        %162 = vperm.xlu0 %161, %v151
        %v163 = vpop.permute.xlu0 %162
        %166 = vset.pattern.permute.xlu0 0
        %167 = vperm.xlu0 %166, %v152
        %v168 = vpop.permute.xlu0 %167
        %171 = vset.pattern.permute.xlu0 0
        %172 = vperm.xlu0 %171, %v153
        %v173 = vpop.permute.xlu0 %172
        %v176 = vlaneseq
        %v177 = vshrl.u32 %v176, 7
        %v178 = vsub.s32 0, %v177
        %v179 = vrot.slane %v154, %v178
        %v181 = vmul.f32 %v158, %v179
        %v182 = vmul.f32 %v163, %v179
        %v183 = vmul.f32 %v168, %v179
        %v184 = vmul.f32 %v173, %v179
        %v185 = vmul.f32 %v181, 0.31830987
        %v186 = vmul.f32 %v182, 0.31830987
        %v187 = vmul.f32 %v183, 0.31830987
        %v188 = vmul.f32 %v184, 0.31830987
        %v189 = vadd.f32 %v185, %v148
        %v190 = vadd.f32 %v186, %v148
        %v191 = vadd.f32 %v187, %v148
        %v192 = vadd.f32 %v188, %v148
        %v193 = vadd.f32 %v189, 0.5
        %v194 = vadd.f32 %v190, 0.5
        %v195 = vadd.f32 %v191, 0.5
        %v196 = vadd.f32 %v192, 0.5
        %v197 = vfloor.f32 %v193
        %v198 = vfloor.f32 %v194
        %v199 = vfloor.f32 %v195
        %v200 = vfloor.f32 %v196
        %v201 = vmul.f32 %v197, 3.140625
        %v202 = vmul.f32 %v198, 3.140625
        %v203 = vmul.f32 %v199, 3.140625
        %v204 = vmul.f32 %v200, 3.140625
        %v205 = vsub.f32 %v181, %v201
        %v206 = vsub.f32 %v182, %v202
        %v207 = vsub.f32 %v183, %v203
        %v208 = vsub.f32 %v184, %v204
        %v209 = vadd.f32 %v205, %v149
        %v210 = vadd.f32 %v206, %v149
        %v211 = vadd.f32 %v207, %v149
        %v212 = vadd.f32 %v208, %v149
        %v213 = vmul.f32 %v197, 0.0009676536
        %v214 = vmul.f32 %v198, 0.0009676536
        %v215 = vmul.f32 %v199, 0.0009676536
        %v216 = vmul.f32 %v200, 0.0009676536
        %v217 = vsub.f32 %v209, %v213
        %v218 = vsub.f32 %v210, %v214
        %v219 = vsub.f32 %v211, %v215
        %v220 = vsub.f32 %v212, %v216
        %v221 = vmul.f32 %v217, %v217
        %v222 = vmul.f32 %v218, %v218
        %v223 = vmul.f32 %v219, %v219
        %v224 = vmul.f32 %v220, %v220
        %v225 = vmul.f32 %v221, 2.7557319e-06
        %v226 = vmul.f32 %v222, 2.7557319e-06
        %v227 = vmul.f32 %v223, 2.7557319e-06
        %v228 = vmul.f32 %v224, 2.7557319e-06
        %v229 = vadd.f32 %v225, -0.0001984127
        %v230 = vadd.f32 %v226, -0.0001984127
        %v231 = vadd.f32 %v227, -0.0001984127
        %v232 = vadd.f32 %v228, -0.0001984127
        %v233 = vmul.f32 %v221, %v229
        %v234 = vmul.f32 %v222, %v230
        %v235 = vmul.f32 %v223, %v231
        %v236 = vmul.f32 %v224, %v232
        %v237 = vadd.f32 %v233, 0.008333334
        %v238 = vadd.f32 %v234, 0.008333334
        %v239 = vadd.f32 %v235, 0.008333334
        %v240 = vadd.f32 %v236, 0.008333334
        %v241 = vmul.f32 %v221, %v237
        %v242 = vmul.f32 %v222, %v238
        %v243 = vmul.f32 %v223, %v239
        %v244 = vmul.f32 %v224, %v240
        %v245 = vadd.f32 %v241, -0.16666667
        %v246 = vadd.f32 %v242, -0.16666667
        %v247 = vadd.f32 %v243, -0.16666667
        %v248 = vadd.f32 %v244, -0.16666667
        %v249 = vmul.f32 %v217, %v221
        %v250 = vmul.f32 %v218, %v222
        %v251 = vmul.f32 %v219, %v223
        %v252 = vmul.f32 %v220, %v224
        %v253 = vmul.f32 %v249, %v245
        %v254 = vmul.f32 %v250, %v246
        %v255 = vmul.f32 %v251, %v247
        %v256 = vmul.f32 %v252, %v248
        %v257 = vadd.f32 %v217, %v253
        %v258 = vadd.f32 %v218, %v254
        %v259 = vadd.f32 %v219, %v255
        %v260 = vadd.f32 %v220, %v256
        %v261 = vcvt.f32.s32.to.zero.pseudo %v197
        %v262 = vcvt.f32.s32.to.zero.pseudo %v198
        %v263 = vcvt.f32.s32.to.zero.pseudo %v199
        %v264 = vcvt.f32.s32.to.zero.pseudo %v200
        %v265 = vand.u32 %v261, 1
        %v266 = vand.u32 %v262, 1
        %v267 = vand.u32 %v263, 1
        %v268 = vand.u32 %v264, 1
        %vm269 = vcmp.eq.s32.totalorder %v265, 1
        %vm270 = vcmp.eq.s32.totalorder %v266, 1
        %vm271 = vcmp.eq.s32.totalorder %v267, 1
        %vm272 = vcmp.eq.s32.totalorder %v268, 1
        %v273 = vsel %vm269, -1.0, 1.0
        %v274 = vsel %vm270, -1.0, 1.0
        %v275 = vsel %vm271, -1.0, 1.0
        %v276 = vsel %vm272, -1.0, 1.0
        %v277 = vmul.f32 %v257, %v273
        %v278 = vmul.f32 %v258, %v274
        %v279 = vmul.f32 %v259, %v275
        %v280 = vmul.f32 %v260, %v276
        %281 = vst [vmem:[%s137] sm:$0xff] %v277
        %282 = vst [vmem:[%s137 + $0x8] sm:$0xff] %v278
        %283 = vst [vmem:[%s137 + $0x10] sm:$0xff] %v279
        %284 = vst [vmem:[%s137 + $0x18] sm:$0xff] %v280
        %s285 = sand.u32 %s71, 1
        %s286 = scalar_lea.sflag [#allocation3], %s285
        %s287 = sand.u32 %s71, 1
        %s288 = smul.addr %s287, 32
        %s289 = scalar_lea.vmem [#allocation2], %s288
        // Predicated region
        $region29: #{tpu_custom_call.1} parent=27 // pred_check
          %p290 = pneg %p81
        $region30: #{tpu_custom_call.1} parent=27 // pred_check_branch
          %292 = sbr.rel (%p290) target = $region32
        $region31: #{tpu_custom_call.1} parent=27 // pred_region
          %s293 = smul.u32 4, %s16
          %s295 = ssub.s32 512, 512
          %296 = vsyncadd %s286, %s295
          %s297 = smul.addr %s293, 128
          %s298 = scalar_lea.hbm %s2, %s297
          %s299 = sshll.u32 %s289, 4
          %s300 = int_to_ptr.vmem [resolvable:$true] %s299
          %305 = dma.vmem_to_hbm [thread:$0]  %s300, 512, %s298, %s286, 128, 128, 8
        $region32: #{tpu_custom_call.1} parent=27 // pred_fallthru
          _
      $region28: #{tpu_custom_call.1} parent=5 // pred_fallthru
        _
      %p306 = scmp.le.s32.totalorder 2, %s11
      // Predicated region
      $region33: #{tpu_custom_call.1} parent=5 // pred_check
        %p307 = pneg %p306
      $region34: #{tpu_custom_call.1} parent=5 // pred_check_branch
        %309 = sbr.rel (%p307) target = $region36
      $region35: #{tpu_custom_call.1} parent=5 // pred_region
        %s310 = ssub.s32 %s11, 2
        // Predicated region
        $region37: #{tpu_custom_call.1} parent=35 // pred_check
          %p311 = pneg %p87
        $region38: #{tpu_custom_call.1} parent=35 // pred_check_branch
          %313 = sbr.rel (%p311) target = $region40
        $region39: #{tpu_custom_call.1} parent=35 // pred_region
          %s314 = sand.u32 %s72, 1
          %s315 = scalar_lea.sflag [#allocation3], %s314
          %s316 = sand.u32 %s72, 1
          %s317 = smul.addr %s316, 32
          %s318 = scalar_lea.vmem [#allocation2], %s317
          %319 = dma.done %s315, 512
        $region40: #{tpu_custom_call.1} parent=35 // pred_fallthru
          _
      $region36: #{tpu_custom_call.1} parent=5 // pred_fallthru
        _
    $region6: #{tpu_custom_call.1} parent=1 // loop_footer
      %s15 = sadd.s32 1, %s11
    $region7: #{tpu_custom_call.1} parent=1 // loop_footer_branch
      %10 = sbr.rel target = $region3
    $region8: #{tpu_custom_call.1} parent=1 // loop_exit
      _
    %320 = vsyncpa [#allocation3], 1
    %s321 = scalar_lea.sflag [#allocation3], 1
    %322 = vsyncpa %s321, 1

</llo_original>
